<compile_context>
chip_gen: v7x
topology: tpu7x:2x2x1
jax: 0.10.0
libtpu: 0.0.40
codegen_flags: <defaults>
</compile_context>

<pallas_src>
import math
from functools import partial

import jax
import jax.numpy as jnp
from jax import lax
from jax.experimental import pallas as pl
from jax.experimental.pallas import tpu as pltpu


# ----------------------------------------------------------------------------
# Fused Pallas kernel: ella connector + unet cross-attention block
# ----------------------------------------------------------------------------
def _fused_kernel(tok_ref, ehs_ref, aux_ref, tb_ref, wp_ref, wkq_ref, wvo_ref,
                  out_ref, kq_sc, vo_sc):
    """Grid = (batch, n_tile).  Block shapes:
      tok_ref  (1, C, tn)  latent tokens, channel-major (N on lanes), f32
      ehs_ref  (1, S, H)   raw encoder hidden states, bf16
      aux_ref  (1, 3, H)   rows: [scale, shift, ella_bias], f32
      tb_ref   (1, C, 1)   per-channel timestep bias, f32 (already on sublanes)
      wp_ref   (H, H)      ella projection, bf16
      wkq_ref  (H, C)      folded  wk @ wq.T / sqrt(D), bf16
      wvo_ref  (H, C)      folded  wv @ wo, bf16
      out_ref  (1, C, tn)  f32
      kq_sc    (S, C)      VMEM scratch (bf16), reused across N tiles
      vo_sc    (S, C)      VMEM scratch (bf16), reused across N tiles
    """
    # ---- ELLA connector + folded k/v projections, hoisted out of the N loop.
    #      Time-aware encoder states never round-trip through HBM.
    @pl.when(pl.program_id(1) == 0)
    def _():
        ehs = ehs_ref[0].astype(jnp.float32)                    # (S, H)
        aux = aux_ref[0]                                        # (3, H) f32
        scale = aux[0:1, :]                                     # (1, H)
        shift = aux[1:2, :]                                     # (1, H)
        bp = aux[2:3, :]                                        # (1, H)

        mean = jnp.mean(ehs, axis=-1, keepdims=True)
        var = jnp.mean(jnp.square(ehs - mean), axis=-1, keepdims=True)
        xn = (ehs - mean) * lax.rsqrt(var + 1e-5)
        modded = (xn * (1.0 + scale) + shift).astype(jnp.bfloat16)
        e = jnp.dot(modded, wp_ref[...],
                    preferred_element_type=jnp.float32) + bp    # (S, H) f32
        e_bf = e.astype(jnp.bfloat16)
        kq_sc[...] = jnp.dot(e_bf, wkq_ref[...],
                             preferred_element_type=jnp.float32
                             ).astype(jnp.bfloat16)             # (S, C)
        vo_sc[...] = jnp.dot(e_bf, wvo_ref[...],
                             preferred_element_type=jnp.float32
                             ).astype(jnp.bfloat16)             # (S, C)

    # ---- Per-N-tile cross-attention, channel-major (lane-dense on N) -------
    xT = tok_ref[0]                                             # (C, tn) f32
    sT = jnp.dot(kq_sc[...], xT.astype(jnp.bfloat16),
                 preferred_element_type=jnp.float32)            # (S, tn)
    m = jnp.max(sT, axis=0, keepdims=True)                      # (1, tn)
    p = jnp.exp(sT - m)                                         # (S, tn) f32
    denom = jnp.sum(p, axis=0, keepdims=True)                   # (1, tn)

    # contract S of v' against S of p without materializing a transpose
    yT = lax.dot_general(vo_sc[...], p.astype(jnp.bfloat16),
                         dimension_numbers=(((0,), (0,)), ((), ())),
                         preferred_element_type=jnp.float32)    # (C, tn)

    # deferred softmax normalization: exact reciprocal on C rows (not S)
    yT = yT * (1.0 / denom) + tb_ref[0]                         # (C,tn)
    out_ref[0] = (xT + yT).astype(out_ref.dtype)                # lane-dense store


def fused_apply(tokens_cm, ehs, aux, tbias, wp, wkq, wvo, *, tn=128):
    """tokens_cm [B,C,N] f32; ehs [B,S,H] bf16; aux [B,3,H] f32;
    tbias [B,C,1] f32; wp/wkq/wvo bf16."""
    B, C, N = tokens_cm.shape
    _, S, H = ehs.shape
    tn = min(tn, N)
    assert N % tn == 0, (N, tn)

    return pl.pallas_call(
        _fused_kernel,
        out_shape=jax.ShapeDtypeStruct((B, C, N), tokens_cm.dtype),
        grid_spec=pltpu.PrefetchScalarGridSpec(
            num_scalar_prefetch=0,
            grid=(B, N // tn),
            in_specs=[
                pl.BlockSpec((1, C, tn), lambda i, n: (i, 0, n)),
                pl.BlockSpec((1, S, H), lambda i, n: (i, 0, 0)),
                pl.BlockSpec((1, 3, H), lambda i, n: (i, 0, 0)),
                pl.BlockSpec((1, C, 1), lambda i, n: (i, 0, 0)),
                pl.BlockSpec((H, H), lambda i, n: (0, 0)),
                pl.BlockSpec((H, C), lambda i, n: (0, 0)),
                pl.BlockSpec((H, C), lambda i, n: (0, 0)),
            ],
            out_specs=pl.BlockSpec((1, C, tn), lambda i, n: (i, 0, n)),
            scratch_shapes=[
                pltpu.VMEM((S, C), jnp.bfloat16),   # k' = e @ wkq / sqrt(D)
                pltpu.VMEM((S, C), jnp.bfloat16),   # v' = e @ wvo
            ],
        ),
        # batch "parallel" -> shards across the 2 TCs on v7x; N axis carries
        # the hoisted scratch, so it must stay sequential ("arbitrary").
        compiler_params=pltpu.CompilerParams(
            dimension_semantics=("parallel", "arbitrary"),
            # > v5e's 16 MiB default scoped limit, < v7x's 64 MiB physical.
            vmem_limit_bytes=48 * 1024 * 1024,
        ),
    )(tokens_cm, ehs, aux, tbias, wp, wkq, wvo)


# ----------------------------------------------------------------------------
# Glue: timestep embedding, parameters, jitted forward, proxy module
# ----------------------------------------------------------------------------
def timestep_embedding(t, dim):
    """Sinusoidal timestep embedding, t: [B] -> [B, dim]."""
    half = dim // 2
    freqs = jnp.exp(
        -math.log(10000.0) * jnp.arange(half, dtype=jnp.float32) / half)
    args = t.astype(jnp.float32)[:, None] * freqs[None, :]
    return jnp.concatenate([jnp.cos(args), jnp.sin(args)], axis=-1)


def init_params(key, *, hidden=32, channels=4, attn_dim=32, temb_dim=32):
    ks = jax.random.split(key, 10)
    sc = 0.05
    return {
        # ella: timestep MLP -> (scale, shift), then linear projection
        "ella_w1": sc * jax.random.normal(ks[0], (temb_dim, temb_dim), jnp.float32),
        "ella_b1": jnp.zeros((temb_dim,), jnp.float32),
        "ella_w2": sc * jax.random.normal(ks[1], (temb_dim, 2 * hidden), jnp.float32),
        "ella_b2": jnp.zeros((2 * hidden,), jnp.float32),
        "ella_wp": sc * jax.random.normal(ks[2], (hidden, hidden), jnp.float32),
        "ella_bp": sc * jax.random.normal(ks[3], (hidden,), jnp.float32),
        # unet: timestep bias MLP + cross-attention projections
        "unet_wt": sc * jax.random.normal(ks[4], (temb_dim, channels), jnp.float32),
        "unet_bt": jnp.zeros((channels,), jnp.float32),
        "unet_wq": sc * jax.random.normal(ks[5], (channels, attn_dim), jnp.float32),
        "unet_wk": sc * jax.random.normal(ks[6], (hidden, attn_dim), jnp.float32),
        "unet_wv": sc * jax.random.normal(ks[7], (hidden, attn_dim), jnp.float32),
        "unet_wo": sc * jax.random.normal(ks[8], (attn_dim, channels), jnp.float32),
    }


@partial(jax.jit, static_argnames=("temb_dim",))
def ella_proxy_unet_forward(params, sample, timestep, encoder_hidden_states,
                            *, temb_dim=32):
    p = params
    B, C, Hs, Ws = sample.shape
    _, S, H = encoder_hidden_states.shape

    t = jnp.broadcast_to(jnp.asarray(timestep, jnp.float32).reshape(-1), (B,))
    temb = timestep_embedding(t, temb_dim)                          # [B, T]

    # ella modulation MLP -> scale / shift
    h = jax.nn.silu(temb @ p["ella_w1"] + p["ella_b1"])
    mod = h @ p["ella_w2"] + p["ella_b2"]                           # [B, 2H]
    scale, shift = jnp.split(mod, 2, axis=-1)                       # [B, H]

    # unet per-channel timestep bias (f32, passed on the sublane axis)
    tbias = jax.nn.silu(temb) @ p["unet_wt"] + p["unet_bt"]         # [B, C]

    # pack per-batch modulation vectors into one small (B, 3, H) block
    aux = jnp.stack([scale, shift,
                     jnp.broadcast_to(p["ella_bp"], (B, H))], axis=1)

    # channel-major latent tokens: pure reshape, no transpose; f32 so the
    # residual path is exact.
    tokens_cm = sample.reshape(B, C, Hs * Ws).astype(jnp.float32)

    # Algebraic fold of q / o projections into the k / v weights (exact for
    # this single-head linear attention); 1/sqrt(D) folded into wkq.
    D = p["unet_wq"].shape[1]
    wkq = (p["unet_wk"] @ p["unet_wq"].T) * (1.0 / math.sqrt(D))    # (H, C)
    wvo = p["unet_wv"] @ p["unet_wo"]                               # (H, C)

    out_cm = fused_apply(
        tokens_cm,
        encoder_hidden_states.astype(jnp.bfloat16),
        aux.astype(jnp.float32),
        tbias[:, :, None].astype(jnp.float32),
        p["ella_wp"].astype(jnp.bfloat16),
        wkq.astype(jnp.bfloat16),
        wvo.astype(jnp.bfloat16),
    )                                                               # (B, C, N)
    return out_cm.reshape(B, C, Hs, Ws)


class ELLAProxyUNetPallas:
    """JAX/Pallas counterpart of ELLAProxyUNet (synthetic ella + unet)."""

    def __init__(self, params, temb_dim=32):
        self.params = params
        self.temb_dim = temb_dim
        self.flexible_max_length_workaround = None
        self.dtype = jnp.float32

    def __call__(self, sample, timestep, encoder_hidden_states,
                 return_dict=True):
        if self.flexible_max_length_workaround is not None:
            # TODO(synk): ragged per-sample max_length slicing needs dynamic
            # shapes; not implemented.
            raise NotImplementedError("flexible_max_length_workaround")
        return ella_proxy_unet_forward(self.params, sample, timestep,
                                       encoder_hidden_states,
                                       temb_dim=self.temb_dim)


# ----------------------------------------------------------------------------
# Pure-JAX f32 reference (un-folded math) for a correctness check
# ----------------------------------------------------------------------------
def reference_forward(params, sample, timestep, ehs, temb_dim=32):
    p = params
    B, C, Hs, Ws = sample.shape
    t = jnp.broadcast_to(jnp.asarray(timestep, jnp.float32).reshape(-1), (B,))
    temb = timestep_embedding(t, temb_dim)
    h = jax.nn.silu(temb @ p["ella_w1"] + p["ella_b1"])
    mod = h @ p["ella_w2"] + p["ella_b2"]
    scale, shift = jnp.split(mod, 2, axis=-1)
    mean = jnp.mean(ehs, axis=-1, keepdims=True)
    var = jnp.mean(jnp.square(ehs - mean), axis=-1, keepdims=True)
    xn = (ehs - mean) * lax.rsqrt(var + 1e-5)
    ta = xn * (1.0 + scale[:, None, :]) + shift[:, None, :]
    ta = jnp.einsum("bsh,hk->bsk", ta, p["ella_wp"]) + p["ella_bp"]

    tbias = jax.nn.silu(temb) @ p["unet_wt"] + p["unet_bt"]
    tokens = jnp.transpose(sample, (0, 2, 3, 1)).reshape(B, Hs * Ws, C)
    q = jnp.einsum("bnc,cd->bnd", tokens, p["unet_wq"])
    k = jnp.einsum("bsh,hd->bsd", ta, p["unet_wk"])
    v = jnp.einsum("bsh,hd->bsd", ta, p["unet_wv"])
    s = jnp.einsum("bnd,bsd->bns", q, k) / math.sqrt(q.shape[-1])
    pr = jax.nn.softmax(s, axis=-1)
    attn = jnp.einsum("bns,bsd->bnd", pr, v)
    y = jnp.einsum("bnd,dc->bnc", attn, p["unet_wo"]) + tbias[:, None, :]
    out_tok = tokens + y
    return jnp.transpose(out_tok.reshape(B, Hs, Ws, C), (0, 3, 1, 2))


# ----------------------------------------------------------------------------
if __name__ == "__main__":
    B, C, HS, WS = 2, 4, 16, 16      # latent sample (NCHW)
    S, HIDDEN = 8, 32                # encoder_hidden_states [B, S, HIDDEN]
    key = jax.random.PRNGKey(0)
    k_params, k_sample, k_ehs = jax.random.split(key, 3)

    params = init_params(k_params, hidden=HIDDEN, channels=C,
                         attn_dim=32, temb_dim=32)
    sample = jax.random.normal(k_sample, (B, C, HS, WS), jnp.float32)
    encoder_hidden_states = jax.random.normal(k_ehs, (B, S, HIDDEN), jnp.float32)
    timestep = jnp.array(500, jnp.int32)

    model = ELLAProxyUNetPallas(params)
    out = jax.block_until_ready(model(sample, timestep, encoder_hidden_states))

    ref = jax.block_until_ready(
        reference_forward(params, sample, timestep, encoder_hidden_states))

    assert out.shape == sample.shape
    # tolerance deliberately widened for bf16 operands on the connector /
    # attention path (residual + softmax normalization stay exact f32)
    assert jnp.allclose(out, ref, atol=5e-3, rtol=5e-3), (
        float(jnp.max(jnp.abs(out - ref))))
    print("KERNEL_OK")
</pallas_src>

<mosaic_0001>
module attributes {stable_mosaic.version = 11 : i64} {
  func.func @_fused_kernel(%arg0: i32, %arg1: i32, %arg2: memref<1x4x128xf32, #tpu.memory_space<vmem>>, %arg3: memref<1x8x32xbf16, #tpu.memory_space<vmem>>, %arg4: memref<1x3x32xf32, #tpu.memory_space<vmem>>, %arg5: memref<1x4x1xf32, #tpu.memory_space<vmem>>, %arg6: memref<32x32xbf16, #tpu.memory_space<vmem>>, %arg7: memref<32x4xbf16, #tpu.memory_space<vmem>>, %arg8: memref<32x4xbf16, #tpu.memory_space<vmem>>, %arg9: memref<1x4x128xf32, #tpu.memory_space<vmem>>, %arg10: memref<8x4xbf16, #tpu.memory_space<vmem>>, %arg11: memref<8x4xbf16, #tpu.memory_space<vmem>>) attributes {dimension_semantics = [#tpu.dimension_semantics<parallel>, #tpu.dimension_semantics<arbitrary>], iteration_bounds = array<i64: 2, 2>, scalar_prefetch = 0 : i64, scratch_operands = 2 : i64, tpu.core_type = #tpu.core_type<tc>, window_params = [{transform_indices = @transform_0, window_bounds = array<i64: 1, 4, 128>}, {transform_indices = @transform_1, window_bounds = array<i64: 1, 8, 32>}, {transform_indices = @transform_2, window_bounds = array<i64: 1, 3, 32>}, {transform_indices = @transform_3, window_bounds = array<i64: 1, 4, 1>}, {pipeline_mode = #tpu.pipeline_mode<synchronous>, transform_indices = @transform_4, window_bounds = array<i64: 32, 32>}, {pipeline_mode = #tpu.pipeline_mode<synchronous>, transform_indices = @transform_5, window_bounds = array<i64: 32, 4>}, {pipeline_mode = #tpu.pipeline_mode<synchronous>, transform_indices = @transform_6, window_bounds = array<i64: 32, 4>}, {transform_indices = @transform_7, window_bounds = array<i64: 1, 4, 128>}]} {
    %c0_i32 = arith.constant 0 : i32
    %0 = arith.cmpi eq, %arg1, %c0_i32 : i32
    %1 = arith.extui %0 : i1 to i32
    %c0_i32_0 = arith.constant 0 : i32
    %2 = arith.cmpi ne, %1, %c0_i32_0 : i32
    scf.if %2 {
      %c0_17 = arith.constant 0 : index
      %c0_18 = arith.constant 0 : index
      %c0_19 = arith.constant 0 : index
      %30 = vector.load %arg3[%c0_17, %c0_18, %c0_19] : memref<1x8x32xbf16, #tpu.memory_space<vmem>>, vector<1x8x32xbf16>
      %31 = vector.shape_cast %30 : vector<1x8x32xbf16> to vector<8x32xbf16>
      %32 = arith.extf %31 : vector<8x32xbf16> to vector<8x32xf32>
      %c0_20 = arith.constant 0 : index
      %c0_21 = arith.constant 0 : index
      %c0_22 = arith.constant 0 : index
      %33 = vector.load %arg4[%c0_20, %c0_21, %c0_22] : memref<1x3x32xf32, #tpu.memory_space<vmem>>, vector<1x3x32xf32>
      %34 = vector.shape_cast %33 : vector<1x3x32xf32> to vector<3x32xf32>
      %35 = vector.extract_strided_slice %34 {offsets = [0, 0], sizes = [1, 32], strides = [1, 1]} : vector<3x32xf32> to vector<1x32xf32>
      %36 = vector.extract_strided_slice %34 {offsets = [1, 0], sizes = [1, 32], strides = [1, 1]} : vector<3x32xf32> to vector<1x32xf32>
      %37 = vector.extract_strided_slice %34 {offsets = [2, 0], sizes = [1, 32], strides = [1, 1]} : vector<3x32xf32> to vector<1x32xf32>
      %cst_23 = arith.constant dense<0.000000e+00> : vector<8xf32>
      %38 = vector.multi_reduction <add>, %32, %cst_23 [1] : vector<8x32xf32> to vector<8xf32>
      %39 = vector.shape_cast %38 : vector<8xf32> to vector<8x1xf32>
      %cst_24 = arith.constant 3.200000e+01 : f32
      %40 = vector.broadcast %cst_24 : f32 to vector<8x1xf32>
      %41 = arith.divf %39, %40 : vector<8x1xf32>
      %42 = vector.broadcast %41 : vector<8x1xf32> to vector<8x32xf32>
      %43 = arith.subf %32, %42 : vector<8x32xf32>
      %44 = arith.mulf %43, %43 : vector<8x32xf32>
      %cst_25 = arith.constant dense<0.000000e+00> : vector<8xf32>
      %45 = vector.multi_reduction <add>, %44, %cst_25 [1] : vector<8x32xf32> to vector<8xf32>
      %46 = vector.shape_cast %45 : vector<8xf32> to vector<8x1xf32>
      %cst_26 = arith.constant 3.200000e+01 : f32
      %47 = vector.broadcast %cst_26 : f32 to vector<8x1xf32>
      %48 = arith.divf %46, %47 : vector<8x1xf32>
      %49 = vector.broadcast %41 : vector<8x1xf32> to vector<8x32xf32>
      %50 = arith.subf %32, %49 : vector<8x32xf32>
      %cst_27 = arith.constant 9.99999974E-6 : f32
      %51 = vector.broadcast %cst_27 : f32 to vector<8x1xf32>
      %52 = arith.addf %48, %51 : vector<8x1xf32>
      %53 = math.rsqrt %52 : vector<8x1xf32>
      %54 = vector.broadcast %53 : vector<8x1xf32> to vector<8x32xf32>
      %55 = arith.mulf %50, %54 : vector<8x32xf32>
      %cst_28 = arith.constant 1.000000e+00 : f32
      %56 = vector.broadcast %cst_28 : f32 to vector<1x32xf32>
      %57 = arith.addf %56, %35 : vector<1x32xf32>
      %58 = vector.broadcast %57 : vector<1x32xf32> to vector<8x32xf32>
      %59 = arith.mulf %55, %58 : vector<8x32xf32>
      %60 = vector.broadcast %36 : vector<1x32xf32> to vector<8x32xf32>
      %61 = arith.addf %59, %60 : vector<8x32xf32>
      %62 = arith.truncf %61 : vector<8x32xf32> to vector<8x32xbf16>
      %c0_29 = arith.constant 0 : index
      %c0_30 = arith.constant 0 : index
      %63 = vector.load %arg6[%c0_29, %c0_30] : memref<32x32xbf16, #tpu.memory_space<vmem>>, vector<32x32xbf16>
      %cst_31 = arith.constant dense<0.000000e+00> : vector<8x32xf32>
      %64 = tpu.matmul %62, %63, %cst_31 {dimension_numbers = #tpu.dot_dimension_numbers<[1], [0], [0], [1], [0, 0, 1, 1], [], []>} : vector<8x32xbf16>, vector<32x32xbf16>, vector<8x32xf32> -> vector<8x32xf32>
      %65 = vector.broadcast %37 : vector<1x32xf32> to vector<8x32xf32>
      %66 = arith.addf %64, %65 : vector<8x32xf32>
      %67 = arith.truncf %66 : vector<8x32xf32> to vector<8x32xbf16>
      %c0_32 = arith.constant 0 : index
      %c0_33 = arith.constant 0 : index
      %68 = vector.load %arg7[%c0_32, %c0_33] : memref<32x4xbf16, #tpu.memory_space<vmem>>, vector<32x4xbf16>
      %cst_34 = arith.constant dense<0.000000e+00> : vector<8x4xf32>
      %69 = tpu.matmul %67, %68, %cst_34 {dimension_numbers = #tpu.dot_dimension_numbers<[1], [0], [0], [1], [0, 0, 1, 1], [], []>} : vector<8x32xbf16>, vector<32x4xbf16>, vector<8x4xf32> -> vector<8x4xf32>
      %70 = arith.truncf %69 : vector<8x4xf32> to vector<8x4xbf16>
      %c0_35 = arith.constant 0 : index
      %c0_36 = arith.constant 0 : index
      %71 = vector.load %arg10[%c0_35, %c0_36] : memref<8x4xbf16, #tpu.memory_space<vmem>>, vector<8x4xbf16>
      tpu.vector_store %arg10[%c0_35, %c0_36], %70 {strides = array<i32>} : memref<8x4xbf16, #tpu.memory_space<vmem>>, vector<8x4xbf16>,
      %c0_37 = arith.constant 0 : index
      %c0_38 = arith.constant 0 : index
      %72 = vector.load %arg8[%c0_37, %c0_38] : memref<32x4xbf16, #tpu.memory_space<vmem>>, vector<32x4xbf16>
      %cst_39 = arith.constant dense<0.000000e+00> : vector<8x4xf32>
      %73 = tpu.matmul %67, %72, %cst_39 {dimension_numbers = #tpu.dot_dimension_numbers<[1], [0], [0], [1], [0, 0, 1, 1], [], []>} : vector<8x32xbf16>, vector<32x4xbf16>, vector<8x4xf32> -> vector<8x4xf32>
      %74 = arith.truncf %73 : vector<8x4xf32> to vector<8x4xbf16>
      %c0_40 = arith.constant 0 : index
      %c0_41 = arith.constant 0 : index
      %75 = vector.load %arg11[%c0_40, %c0_41] : memref<8x4xbf16, #tpu.memory_space<vmem>>, vector<8x4xbf16>
      tpu.vector_store %arg11[%c0_40, %c0_41], %74 {strides = array<i32>} : memref<8x4xbf16, #tpu.memory_space<vmem>>, vector<8x4xbf16>,
    } else {
    }
    %c0 = arith.constant 0 : index
    %c0_1 = arith.constant 0 : index
    %c0_2 = arith.constant 0 : index
    %3 = vector.load %arg2[%c0, %c0_1, %c0_2] : memref<1x4x128xf32, #tpu.memory_space<vmem>>, vector<1x4x128xf32>
    %4 = vector.shape_cast %3 : vector<1x4x128xf32> to vector<4x128xf32>
    %c0_3 = arith.constant 0 : index
    %c0_4 = arith.constant 0 : index
    %5 = vector.load %arg10[%c0_3, %c0_4] : memref<8x4xbf16, #tpu.memory_space<vmem>>, vector<8x4xbf16>
    %6 = arith.truncf %4 : vector<4x128xf32> to vector<4x128xbf16>
    %cst = arith.constant dense<0.000000e+00> : vector<8x128xf32>
    %7 = tpu.matmul %5, %6, %cst {dimension_numbers = #tpu.dot_dimension_numbers<[1], [0], [0], [1], [0, 0, 1, 1], [], []>} : vector<8x4xbf16>, vector<4x128xbf16>, vector<8x128xf32> -> vector<8x128xf32>
    %cst_5 = arith.constant dense<0xFF800000> : vector<128xf32>
    %8 = vector.multi_reduction <maximumf>, %7, %cst_5 [0] : vector<8x128xf32> to vector<128xf32>
    %9 = vector.shape_cast %8 : vector<128xf32> to vector<1x128xf32>
    %10 = vector.broadcast %9 : vector<1x128xf32> to vector<8x128xf32>
    %11 = arith.subf %7, %10 : vector<8x128xf32>
    %12 = math.exp %11 : vector<8x128xf32>
    %cst_6 = arith.constant dense<0.000000e+00> : vector<128xf32>
    %13 = vector.multi_reduction <add>, %12, %cst_6 [0] : vector<8x128xf32> to vector<128xf32>
    %14 = vector.shape_cast %13 : vector<128xf32> to vector<1x128xf32>
    %c0_7 = arith.constant 0 : index
    %c0_8 = arith.constant 0 : index
    %15 = vector.load %arg11[%c0_7, %c0_8] : memref<8x4xbf16, #tpu.memory_space<vmem>>, vector<8x4xbf16>
    %16 = arith.truncf %12 : vector<8x128xf32> to vector<8x128xbf16>
    %cst_9 = arith.constant dense<0.000000e+00> : vector<4x128xf32>
    %17 = tpu.matmul %15, %16, %cst_9 {dimension_numbers = #tpu.dot_dimension_numbers<[0], [0], [1], [1], [0, 1, 1, 1], [], []>} : vector<8x4xbf16>, vector<8x128xbf16>, vector<4x128xf32> -> vector<4x128xf32>
    %cst_10 = arith.constant 1.000000e+00 : f32
    %18 = vector.broadcast %cst_10 : f32 to vector<1x128xf32>
    %19 = arith.divf %18, %14 : vector<1x128xf32>
    %20 = vector.broadcast %19 : vector<1x128xf32> to vector<4x128xf32>
    %21 = arith.mulf %17, %20 : vector<4x128xf32>
    %c0_11 = arith.constant 0 : index
    %c0_12 = arith.constant 0 : index
    %c0_13 = arith.constant 0 : index
    %22 = vector.load %arg5[%c0_11, %c0_12, %c0_13] : memref<1x4x1xf32, #tpu.memory_space<vmem>>, vector<1x4x1xf32>
    %23 = vector.shape_cast %22 : vector<1x4x1xf32> to vector<4x1xf32>
    %24 = vector.broadcast %23 : vector<4x1xf32> to vector<4x128xf32>
    %25 = arith.addf %21, %24 : vector<4x128xf32>
    %26 = arith.addf %4, %25 : vector<4x128xf32>
    %c0_14 = arith.constant 0 : index
    %c0_15 = arith.constant 0 : index
    %c0_16 = arith.constant 0 : index
    %27 = vector.load %arg9[%c0_14, %c0_15, %c0_16] : memref<1x4x128xf32, #tpu.memory_space<vmem>>, vector<1x4x128xf32>
    %28 = vector.shape_cast %27 : vector<1x4x128xf32> to vector<4x128xf32>
    %29 = vector.shape_cast %26 : vector<4x128xf32> to vector<1x4x128xf32>
    tpu.vector_store %arg9[%c0_14, %c0_15, %c0_16], %29 {strides = array<i32>} : memref<1x4x128xf32, #tpu.memory_space<vmem>>, vector<1x4x128xf32>,
    return
  }
  func.func @transform_0(%arg0: i32, %arg1: i32) -> (i32, i32, i32) {
    %c0_i32 = arith.constant 0 : i32
    %c0_i32_0 = arith.constant 0 : i32
    return %arg0, %c0_i32, %arg1 : i32, i32, i32
  }
  func.func @transform_1(%arg0: i32, %arg1: i32) -> (i32, i32, i32) {
    %c0_i32 = arith.constant 0 : i32
    %c0_i32_0 = arith.constant 0 : i32
    %c0_i32_1 = arith.constant 0 : i32
    return %arg0, %c0_i32, %c0_i32_0 : i32, i32, i32
  }
  func.func @transform_2(%arg0: i32, %arg1: i32) -> (i32, i32, i32) {
    %c0_i32 = arith.constant 0 : i32
    %c0_i32_0 = arith.constant 0 : i32
    %c0_i32_1 = arith.constant 0 : i32
    return %arg0, %c0_i32, %c0_i32_0 : i32, i32, i32
  }
  func.func @transform_3(%arg0: i32, %arg1: i32) -> (i32, i32, i32) {
    %c0_i32 = arith.constant 0 : i32
    %c0_i32_0 = arith.constant 0 : i32
    %c0_i32_1 = arith.constant 0 : i32
    return %arg0, %c0_i32, %c0_i32_0 : i32, i32, i32
  }
  func.func @transform_4(%arg0: i32, %arg1: i32) -> (i32, i32) {
    %c0_i32 = arith.constant 0 : i32
    %c0_i32_0 = arith.constant 0 : i32
    %c0_i32_1 = arith.constant 0 : i32
    return %c0_i32, %c0_i32_0 : i32, i32
  }
  func.func @transform_5(%arg0: i32, %arg1: i32) -> (i32, i32) {
    %c0_i32 = arith.constant 0 : i32
    %c0_i32_0 = arith.constant 0 : i32
    %c0_i32_1 = arith.constant 0 : i32
    return %c0_i32, %c0_i32_0 : i32, i32
  }
  func.func @transform_6(%arg0: i32, %arg1: i32) -> (i32, i32) {
    %c0_i32 = arith.constant 0 : i32
    %c0_i32_0 = arith.constant 0 : i32
    %c0_i32_1 = arith.constant 0 : i32
    return %c0_i32, %c0_i32_0 : i32, i32
  }
  func.func @transform_7(%arg0: i32, %arg1: i32) -> (i32, i32, i32) {
    %c0_i32 = arith.constant 0 : i32
    %c0_i32_0 = arith.constant 0 : i32
    return %arg0, %c0_i32, %arg1 : i32, i32, i32
  }
}

</mosaic_0001>

<llo_original>
// kernel: ella_proxy_unet_forward.1
$region0: #{ella_proxy_unet_forward.1}
  #allocation0 [shape = 'u32[]', space=smem, size = 0x4, offset = 0x4, fixed_abs, tag = 'smem constant byte address 0x4 - core index']
  #allocation1 [shape = 'u32[144,128]{1,0:T(1,128)}', space=vmem, size = 0x12000, scoped, tag = 'internal scratch']
  #allocation2 [shape = 'bf16[8,4]{1,0:T(8,128)(2,1)}', space=vmem, size = 0x800, scoped, tag = 'scratch operand']
  #allocation3 [shape = 'bf16[8,4]{1,0:T(8,128)(2,1)}', space=vmem, size = 0x800, scoped, tag = 'scratch operand']
  %s0 = inlined_call_operand.vmem [shape: f32[2,4,256], index: 0, kind: input, shape index: {}]
  %s1 = inlined_call_operand.vmem [shape: bf16[2,8,32], index: 1, kind: input, shape index: {}]
  %s2 = inlined_call_operand.vmem [shape: f32[2,3,32], index: 2, kind: input, shape index: {}]
  %s3 = inlined_call_operand.vmem [shape: f32[2,4,1], index: 3, kind: input, shape index: {}]
  %s4 = inlined_call_operand.vmem [shape: bf16[32,32], index: 4, kind: input, shape index: {}]
  %s5 = inlined_call_operand.vmem [shape: bf16[32,4], index: 5, kind: input, shape index: {}]
  %s6 = inlined_call_operand.vmem [shape: bf16[32,4], index: 6, kind: input, shape index: {}]
  %s7 = inlined_call_operand.vmem [shape: f32[2,4,256], index: 7, kind: output, shape index: {}]
  %s8 = sld [smem:[#allocation0]]
  $region65: #{ella_proxy_unet_forward.1} parent=0
    _
  %s10 = ssub.s32 1, %s8
  %s11 = scalar_select 0, %s10, %s8
  loop: start=0, step=1, limit=6
  $region2: #{ella_proxy_unet_forward.1} parent=0 // loop_pre_header
    _
  $region3: #{ella_proxy_unet_forward.1} parent=0 // loop_header
    %s13 = sphi 0, %s17
    %p14 = scmp.ge.s32.totalorder %s13, 6
    %s20 = sphi 0, %s32
    %s21 = sphi 0, %s28
    %s22 = sphi 0, %s20
    %s23 = sphi 0, %s21
    %s24 = sphi 0, %s22
    %s25 = sphi 0, %s23
    %s37 = sphi 0, %s39
    %s40 = sphi 0, %s37
    %s41 = sphi 0, %s40
    %s57 = sphi 0, %s41
    %s63 = sphi 0, %s65
    %s66 = sphi 0, %s63
    %s67 = sphi 0, %s66
    %s83 = sphi 0, %s67
    %s89 = sphi 0, %s91
    %s92 = sphi 0, %s89
    %s93 = sphi 0, %s92
    %s109 = sphi 0, %s93
    %s115 = sphi 0, %s117
    %s118 = sphi 0, %s115
    %s119 = sphi 0, %s118
    %s135 = sphi 0, %s119
    %s139 = sphi 0, %s139
    %s141 = sphi 0, %s139
    %s142 = sphi 0, %s141
    %s156 = sphi 0, %s142
    %s160 = sphi 0, %s160
    %s162 = sphi 0, %s160
    %s163 = sphi 0, %s162
    %s177 = sphi 0, %s163
    %s181 = sphi 0, %s181
    %s183 = sphi 0, %s181
    %s184 = sphi 0, %s183
    %s198 = sphi 0, %s184
    %s206 = sphi 0, %s208
    %s209 = sphi 0, %s206
    %s210 = sphi 0, %s209
    %s226 = sphi 0, %s210
  $region4: #{ella_proxy_unet_forward.1} parent=0 // loop_header_branch
    %16 = sbr.rel (%p14) target = $region8
  $region5: #{ella_proxy_unet_forward.1} parent=0 // loop_body
    %s18 = ssub.s32 %s13, 1
    %s19 = ssub.s32 %s13, 2
    %s26 = sadd.s32 1, %s21
    %p27 = scmp.ge.s32.totalorder %s26, 2
    %s28 = scalar_select %p27, 0, %s26
    %s29 = sadd.s32 1, %s20
    %s30 = scalar_select %p27, %s29, %s20
    %p31 = scmp.ge.s32.totalorder %s30, 2
    %s32 = scalar_select %p31, 0, %s30
    %s33 = ssub.s32 %s20, %s32
    %s34 = ssub.s32 %s21, %s28
    %s35 = sor.u32 %s33, %s34
    %p36 = scmp.eq.s32.totalorder %s35, 0
    %s38 = sadd.s32 %s37, 1
    %s39 = scalar_select %p36, %s37, %s38
    %p42 = pneg %p36
    %p43 = scmp.eq.s32.totalorder %s13, 3
    %p44 = por %p42, %p43
    %p45 = scmp.ne.s32.totalorder %s37, %s40
    %p46 = scmp.eq.s32.totalorder %s13, 0
    %p47 = por %p45, %p46
    %p48 = scmp.ne.s32.totalorder %s37, %s40
    %p49 = scmp.eq.s32.totalorder %s18, 3
    %p50 = por %p48, %p49
    %p51 = scmp.ne.s32.totalorder %s40, %s41
    %p52 = scmp.eq.s32.totalorder %s18, 0
    %p53 = por %p51, %p52
    %p54 = scmp.ne.s32.totalorder %s40, %s41
    %p55 = scmp.eq.s32.totalorder %s19, 3
    %p56 = por %p54, %p55
    %p58 = scmp.ne.s32.totalorder %s41, %s57
    %p59 = scmp.eq.s32.totalorder %s19, 0
    %p60 = por %p58, %p59
    %s61 = ssub.s32 %s20, %s32
    %p62 = scmp.eq.s32.totalorder %s61, 0
    %s64 = sadd.s32 %s63, 1
    %s65 = scalar_select %p62, %s63, %s64
    %p68 = pneg %p62
    %p69 = scmp.eq.s32.totalorder %s13, 3
    %p70 = por %p68, %p69
    %p71 = scmp.ne.s32.totalorder %s63, %s66
    %p72 = scmp.eq.s32.totalorder %s13, 0
    %p73 = por %p71, %p72
    %p74 = scmp.ne.s32.totalorder %s63, %s66
    %p75 = scmp.eq.s32.totalorder %s18, 3
    %p76 = por %p74, %p75
    %p77 = scmp.ne.s32.totalorder %s66, %s67
    %p78 = scmp.eq.s32.totalorder %s18, 0
    %p79 = por %p77, %p78
    %p80 = scmp.ne.s32.totalorder %s66, %s67
    %p81 = scmp.eq.s32.totalorder %s19, 3
    %p82 = por %p80, %p81
    %p84 = scmp.ne.s32.totalorder %s67, %s83
    %p85 = scmp.eq.s32.totalorder %s19, 0
    %p86 = por %p84, %p85
    %s87 = ssub.s32 %s20, %s32
    %p88 = scmp.eq.s32.totalorder %s87, 0
    %s90 = sadd.s32 %s89, 1
    %s91 = scalar_select %p88, %s89, %s90
    %p94 = pneg %p88
    %p95 = scmp.eq.s32.totalorder %s13, 3
    %p96 = por %p94, %p95
    %p97 = scmp.ne.s32.totalorder %s89, %s92
    %p98 = scmp.eq.s32.totalorder %s13, 0
    %p99 = por %p97, %p98
    %p100 = scmp.ne.s32.totalorder %s89, %s92
    %p101 = scmp.eq.s32.totalorder %s18, 3
    %p102 = por %p100, %p101
    %p103 = scmp.ne.s32.totalorder %s92, %s93
    %p104 = scmp.eq.s32.totalorder %s18, 0
    %p105 = por %p103, %p104
    %p106 = scmp.ne.s32.totalorder %s92, %s93
    %p107 = scmp.eq.s32.totalorder %s19, 3
    %p108 = por %p106, %p107
    %p110 = scmp.ne.s32.totalorder %s93, %s109
    %p111 = scmp.eq.s32.totalorder %s19, 0
    %p112 = por %p110, %p111
    %s113 = ssub.s32 %s20, %s32
    %p114 = scmp.eq.s32.totalorder %s113, 0
    %s116 = sadd.s32 %s115, 1
    %s117 = scalar_select %p114, %s115, %s116
    %p120 = pneg %p114
    %p121 = scmp.eq.s32.totalorder %s13, 3
    %p122 = por %p120, %p121
    %p123 = scmp.ne.s32.totalorder %s115, %s118
    %p124 = scmp.eq.s32.totalorder %s13, 0
    %p125 = por %p123, %p124
    %p126 = scmp.ne.s32.totalorder %s115, %s118
    %p127 = scmp.eq.s32.totalorder %s18, 3
    %p128 = por %p126, %p127
    %p129 = scmp.ne.s32.totalorder %s118, %s119
    %p130 = scmp.eq.s32.totalorder %s18, 0
    %p131 = por %p129, %p130
    %p132 = scmp.ne.s32.totalorder %s118, %s119
    %p133 = scmp.eq.s32.totalorder %s19, 3
    %p134 = por %p132, %p133
    %p136 = scmp.ne.s32.totalorder %s119, %s135
    %p137 = scmp.eq.s32.totalorder %s19, 0
    %p138 = por %p136, %p137
    %s140 = sadd.s32 %s139, 1
    %p143 = scmp.eq.s32.totalorder %s13, 3
    %p144 = scmp.ne.s32.totalorder %s139, %s141
    %p145 = scmp.eq.s32.totalorder %s13, 0
    %p146 = por %p144, %p145
    %p147 = scmp.ne.s32.totalorder %s139, %s141
    %p148 = scmp.eq.s32.totalorder %s18, 3
    %p149 = por %p147, %p148
    %p150 = scmp.ne.s32.totalorder %s141, %s142
    %p151 = scmp.eq.s32.totalorder %s18, 0
    %p152 = por %p150, %p151
    %p153 = scmp.ne.s32.totalorder %s141, %s142
    %p154 = scmp.eq.s32.totalorder %s19, 3
    %p155 = por %p153, %p154
    %p157 = scmp.ne.s32.totalorder %s142, %s156
    %p158 = scmp.eq.s32.totalorder %s19, 0
    %p159 = por %p157, %p158
    %s161 = sadd.s32 %s160, 1
    %p164 = scmp.eq.s32.totalorder %s13, 3
    %p165 = scmp.ne.s32.totalorder %s160, %s162
    %p166 = scmp.eq.s32.totalorder %s13, 0
    %p167 = por %p165, %p166
    %p168 = scmp.ne.s32.totalorder %s160, %s162
    %p169 = scmp.eq.s32.totalorder %s18, 3
    %p170 = por %p168, %p169
    %p171 = scmp.ne.s32.totalorder %s162, %s163
    %p172 = scmp.eq.s32.totalorder %s18, 0
    %p173 = por %p171, %p172
    %p174 = scmp.ne.s32.totalorder %s162, %s163
    %p175 = scmp.eq.s32.totalorder %s19, 3
    %p176 = por %p174, %p175
    %p178 = scmp.ne.s32.totalorder %s163, %s177
    %p179 = scmp.eq.s32.totalorder %s19, 0
    %p180 = por %p178, %p179
    %s182 = sadd.s32 %s181, 1
    %p185 = scmp.eq.s32.totalorder %s13, 3
    %p186 = scmp.ne.s32.totalorder %s181, %s183
    %p187 = scmp.eq.s32.totalorder %s13, 0
    %p188 = por %p186, %p187
    %p189 = scmp.ne.s32.totalorder %s181, %s183
    %p190 = scmp.eq.s32.totalorder %s18, 3
    %p191 = por %p189, %p190
    %p192 = scmp.ne.s32.totalorder %s183, %s184
    %p193 = scmp.eq.s32.totalorder %s18, 0
    %p194 = por %p192, %p193
    %p195 = scmp.ne.s32.totalorder %s183, %s184
    %p196 = scmp.eq.s32.totalorder %s19, 3
    %p197 = por %p195, %p196
    %p199 = scmp.ne.s32.totalorder %s184, %s198
    %p200 = scmp.eq.s32.totalorder %s19, 0
    %p201 = por %p199, %p200
    %s202 = ssub.s32 %s20, %s32
    %s203 = ssub.s32 %s21, %s28
    %s204 = sor.u32 %s202, %s203
    %p205 = scmp.eq.s32.totalorder %s204, 0
    %s207 = sadd.s32 %s206, 1
    %s208 = scalar_select %p205, %s206, %s207
    %p211 = pneg %p205
    %p212 = scmp.eq.s32.totalorder %s13, 3
    %p213 = por %p211, %p212
    %p214 = scmp.ne.s32.totalorder %s206, %s209
    %p215 = scmp.eq.s32.totalorder %s13, 0
    %p216 = por %p214, %p215
    %p217 = scmp.ne.s32.totalorder %s206, %s209
    %p218 = scmp.eq.s32.totalorder %s18, 3
    %p219 = por %p217, %p218
    %p220 = scmp.ne.s32.totalorder %s209, %s210
    %p221 = scmp.eq.s32.totalorder %s18, 0
    %p222 = por %p220, %p221
    %p223 = scmp.ne.s32.totalorder %s209, %s210
    %p224 = scmp.eq.s32.totalorder %s19, 3
    %p225 = por %p223, %p224
    %p227 = scmp.ne.s32.totalorder %s210, %s226
    %p228 = scmp.eq.s32.totalorder %s19, 0
    %p229 = por %p227, %p228
    %p230 = scmp.le.s32.totalorder 1, %s13
    %p231 = scmp.lt.s32.totalorder %s13, 5
    %p232 = pnand %p230, %p231
    %p233 = pneg %p232
    // Predicated region
    $region9: #{ella_proxy_unet_forward.1} parent=5 // pred_check
      _
    $region10: #{ella_proxy_unet_forward.1} parent=5 // pred_check_branch
      %235 = sbr.rel (%p232) target = $region12
    $region11: #{ella_proxy_unet_forward.1} parent=5 // pred_region
      %s236 = ssub.s32 %s13, 1
      // Predicated region
      $region13: #{ella_proxy_unet_forward.1} parent=11 // pred_check
        %p237 = pneg %p152
      $region14: #{ella_proxy_unet_forward.1} parent=11 // pred_check_branch
        %239 = sbr.rel (%p237) target = $region16
      $region15: #{ella_proxy_unet_forward.1} parent=11 // pred_region
        _
      $region16: #{ella_proxy_unet_forward.1} parent=11 // pred_fallthru
        _
      // Predicated region
      $region17: #{ella_proxy_unet_forward.1} parent=11 // pred_check
        %p240 = pneg %p173
      $region18: #{ella_proxy_unet_forward.1} parent=11 // pred_check_branch
        %242 = sbr.rel (%p240) target = $region20
      $region19: #{ella_proxy_unet_forward.1} parent=11 // pred_region
        _
      $region20: #{ella_proxy_unet_forward.1} parent=11 // pred_fallthru
        _
      // Predicated region
      $region21: #{ella_proxy_unet_forward.1} parent=11 // pred_check
        %p243 = pneg %p194
      $region22: #{ella_proxy_unet_forward.1} parent=11 // pred_check_branch
        %245 = sbr.rel (%p243) target = $region24
      $region23: #{ella_proxy_unet_forward.1} parent=11 // pred_region
        _
      $region24: #{ella_proxy_unet_forward.1} parent=11 // pred_fallthru
        _
    $region12: #{ella_proxy_unet_forward.1} parent=5 // pred_fallthru
      _
    %p246 = scmp.lt.s32.totalorder %s13, 4
    // Predicated region
    $region25: #{ella_proxy_unet_forward.1} parent=5 // pred_check
      %p247 = pneg %p246
    $region26: #{ella_proxy_unet_forward.1} parent=5 // pred_check_branch
      %249 = sbr.rel (%p247) target = $region28
    $region27: #{ella_proxy_unet_forward.1} parent=5 // pred_region
      // Predicated region
      $region29: #{ella_proxy_unet_forward.1} parent=27 // pred_check
        %p250 = pneg %p47
      $region30: #{ella_proxy_unet_forward.1} parent=27 // pred_check_branch
        %252 = sbr.rel (%p250) target = $region32
      $region31: #{ella_proxy_unet_forward.1} parent=27 // pred_region
        %p253 = scmp.lt.s32.totalorder %s20, 1
        %s254 = scalar_select %p253, %s20, 1
        %p255 = scmp.lt.s32.totalorder %s21, 1
        %s256 = scalar_select %p255, %s21, 1
        %s257 = smul.addr %s254, 2
        %s258 = sadd.s32 %s256, %s257
        %s259 = smul.addr %s258, 4
        %s260 = scalar_lea.vmem %s0, %s259
      $region32: #{ella_proxy_unet_forward.1} parent=27 // pred_fallthru
        _
      // Predicated region
      $region33: #{ella_proxy_unet_forward.1} parent=27 // pred_check
        %p261 = pneg %p73
      $region34: #{ella_proxy_unet_forward.1} parent=27 // pred_check_branch
        %263 = sbr.rel (%p261) target = $region36
      $region35: #{ella_proxy_unet_forward.1} parent=27 // pred_region
        %p264 = scmp.lt.s32.totalorder %s20, 1
        %s265 = scalar_select %p264, %s20, 1
        %s266 = smul.addr %s265, 4
        %s267 = scalar_lea.vmem %s1, %s266
      $region36: #{ella_proxy_unet_forward.1} parent=27 // pred_fallthru
        _
      // Predicated region
      $region37: #{ella_proxy_unet_forward.1} parent=27 // pred_check
        %p268 = pneg %p99
      $region38: #{ella_proxy_unet_forward.1} parent=27 // pred_check_branch
        %270 = sbr.rel (%p268) target = $region40
      $region39: #{ella_proxy_unet_forward.1} parent=27 // pred_region
        %p271 = scmp.lt.s32.totalorder %s20, 1
        %s272 = scalar_select %p271, %s20, 1
        %s273 = smul.addr %s272, 4
        %s274 = scalar_lea.vmem %s2, %s273
      $region40: #{ella_proxy_unet_forward.1} parent=27 // pred_fallthru
        _
      // Predicated region
      $region41: #{ella_proxy_unet_forward.1} parent=27 // pred_check
        %p275 = pneg %p125
      $region42: #{ella_proxy_unet_forward.1} parent=27 // pred_check_branch
        %277 = sbr.rel (%p275) target = $region44
      $region43: #{ella_proxy_unet_forward.1} parent=27 // pred_region
        %p278 = scmp.lt.s32.totalorder %s20, 1
        %s279 = scalar_select %p278, %s20, 1
        %s280 = smul.addr %s279, 4
        %s281 = scalar_lea.vmem %s3, %s280
      $region44: #{ella_proxy_unet_forward.1} parent=27 // pred_fallthru
        _
    $region28: #{ella_proxy_unet_forward.1} parent=5 // pred_fallthru
      _
    %p282 = scmp.le.s32.totalorder 1, %s13
    %p283 = scmp.lt.s32.totalorder %s13, 5
    %p284 = pnand %p282, %p283
    %p285 = pneg %p284
    // Predicated region
    $region45: #{ella_proxy_unet_forward.1} parent=5 // pred_check
      _
    $region46: #{ella_proxy_unet_forward.1} parent=5 // pred_check_branch
      %287 = sbr.rel (%p284) target = $region48
    $region47: #{ella_proxy_unet_forward.1} parent=5 // pred_region
      %s288 = ssub.s32 %s13, 1
      %p289 = scmp.lt.s32.totalorder %s22, 1
      %s290 = scalar_select %p289, %s22, 1
      %p291 = scmp.lt.s32.totalorder %s23, 1
      %s292 = scalar_select %p291, %s23, 1
      %s293 = smul.addr %s290, 2
      %s294 = sadd.s32 %s292, %s293
      %s295 = smul.addr %s294, 4
      %s296 = scalar_lea.vmem %s0, %s295
      %p297 = pneg %p53
      %p298 = pneg %p50
      %p299 = scmp.lt.s32.totalorder %s22, 1
      %s300 = scalar_select %p299, %s22, 1
      %s301 = smul.addr %s300, 4
      %s302 = scalar_lea.vmem %s1, %s301
      %p303 = pneg %p79
      %p304 = pneg %p76
      %p305 = scmp.lt.s32.totalorder %s22, 1
      %s306 = scalar_select %p305, %s22, 1
      %s307 = smul.addr %s306, 4
      %s308 = scalar_lea.vmem %s2, %s307
      %p309 = pneg %p105
      %p310 = pneg %p102
      %p311 = scmp.lt.s32.totalorder %s22, 1
      %s312 = scalar_select %p311, %s22, 1
      %s313 = smul.addr %s312, 4
      %s314 = scalar_lea.vmem %s3, %s313
      %p315 = pneg %p131
      %p316 = pneg %p128
      %p317 = pneg %p152
      %p318 = pneg %p149
      %p319 = pneg %p173
      %p320 = pneg %p170
      %p321 = pneg %p194
      %p322 = pneg %p191
      %p323 = pneg %p222
      %p324 = pneg %p219
      %p325 = scmp.lt.s32.totalorder %s22, 1
      %s326 = scalar_select %p325, %s22, 1
      %p327 = scmp.lt.s32.totalorder %s23, 1
      %s328 = scalar_select %p327, %s23, 1
      %s329 = smul.addr %s326, 2
      %s330 = sadd.s32 %s328, %s329
      %s331 = smul.addr %s330, 4
      %s332 = scalar_lea.vmem %s7, %s331
      %p333 = scmp.lt.s32.totalorder %s22, 1
      %s334 = scalar_select %p333, %s22, 1
      %p335 = scmp.lt.s32.totalorder %s23, 1
      %s336 = scalar_select %p335, %s23, 1
      %s337 = smul.addr %s334, 2
      %s338 = sadd.s32 %s336, %s337
      %s339 = smul.addr %s338, 4
      %s340 = scalar_lea.vmem %s0, %s339
      %p341 = scmp.lt.s32.totalorder %s22, 1
      %s342 = scalar_select %p341, %s22, 1
      %s343 = smul.addr %s342, 4
      %s344 = scalar_lea.vmem %s1, %s343
      %p345 = scmp.lt.s32.totalorder %s22, 1
      %s346 = scalar_select %p345, %s22, 1
      %s347 = smul.addr %s346, 4
      %s348 = scalar_lea.vmem %s2, %s347
      %p349 = scmp.lt.s32.totalorder %s22, 1
      %s350 = scalar_select %p349, %s22, 1
      %s351 = smul.addr %s350, 4
      %s352 = scalar_lea.vmem %s3, %s351
      %p353 = scmp.lt.s32.totalorder %s22, 1
      %s354 = scalar_select %p353, %s22, 1
      %p355 = scmp.lt.s32.totalorder %s23, 1
      %s356 = scalar_select %p355, %s23, 1
      %s357 = smul.addr %s354, 2
      %s358 = sadd.s32 %s356, %s357
      %s359 = smul.addr %s358, 4
      %s360 = scalar_lea.vmem %s7, %s359
      %p362 = scmp.eq.s32.totalorder %s23, 0
      // Predicated region
      $region49: #{ella_proxy_unet_forward.1} parent=47 // pred_check
        %p363 = pneg %p362
      $region50: #{ella_proxy_unet_forward.1} parent=47 // pred_check_branch
        %365 = sbr.rel (%p363) target = $region52
      $region51: #{ella_proxy_unet_forward.1} parent=47 // pred_region
        %v366 = vld [vmem:[%s344] sm:$0xf]
        %v367 = vunpack.c.l.bf16 %v366
        %v368 = vld [vmem:[%s348] sm:$0x7]
        %vm369 = vcmask 261120
        %v370 = vsel %vm369, %v367, 0.0
        %371 = vadd.xlane.f32.xlu0 %v370
        %v372 = vpop.xlane.xlu0 %371
        %v373 = vrcp.pop 32.0
        %v374 = vmul.f32 %v372, %v373
        %v375 = vsub.f32 %v367, %v374
        %v376 = vmul.f32 %v375, %v375
        %v377 = vsel %vm369, %v376, 0.0
        %378 = vadd.xlane.f32.xlu0 %v377
        %v379 = vpop.xlane.xlu0 %378
        %v380 = vmul.f32 %v379, %v373
        %v381 = vadd.f32 %v380, 1e-05
        %v382 = vrsqrt.pop %v381
        %v383 = vmul.f32 %v375, %v382
        %v384 = vadd.f32 %v368, 1.0
        %v385 = vlaneseq
        %v386 = vshrl.u32 %v385, 7
        %v387 = vsub.s32 0, %v386
        %v388 = vrot.slane %v384, %v387
        %v389 = vmul.f32 %v383, %v388
        %v390 = vlaneseq
        %v391 = vshrl.u32 %v390, 7
        %v392 = vsub.s32 1, %v391
        %v393 = vrot.slane %v368, %v392
        %v394 = vadd.f32 %v389, %v393
        %v395 = vpack.c.bf16 %v394, %v394
        %v396 = vld [vmem:[%s4] sm:$0xf]
        %v397 = vld [vmem:[%s4 + $0x4] sm:$0xf]
        %v398 = vld [vmem:[%s4 + $0x8] sm:$0xf]
        %v399 = vld [vmem:[%s4 + $0xc] sm:$0xf]
        %v400 = vlaneseq
        %v401 = vshrl.u32 %v400, 7
        %v402 = vsub.s32 2, %v401
        %v403 = vrot.slane %v368, %v402
        %v408 = vunpack.c.l.b16 %v396
        %v409 = vunpack.c.l.b16 %v397
        %v410 = vunpack.c.l.b16 %v398
        %v411 = vunpack.c.l.b16 %v399
        %v412 = vpack.c.b16 %v409, %v408
        %v413 = vpack.c.b16 %v411, %v410
        %v417 = vsel %vm369, %v395, 0
        %419 = vmatprep.subr.bf16.mxu0 0
        %420 = vmatpush1.bf16.msra.mxu0 %v412
        %421 = vmatprep.subr.bf16.mxu0 0
        %422 = vmatpush1.bf16.msra.mxu0 %v413
        %423 = vmatprep.subr.bf16.mxu0 0
        %424 = vmatpush1.bf16.msra.mxu0 0
        %425 = vmatprep.subr.bf16.mxu0 0
        %426 = vmatpush1.bf16.msra.mxu0 0
        %427 = vmatprep.subr.bf16.mxu0 0
        %428 = vmatpush1.bf16.msra.mxu0 0
        %429 = vmatprep.subr.bf16.mxu0 0
        %430 = vmatpush1.bf16.msra.mxu0 0
        %431 = vmatprep.subr.bf16.mxu0 0
        %432 = vmatpush1.bf16.msra.mxu0 0
        %433 = vmatprep.subr.bf16.mxu0 0
        %434 = vmatpush1.bf16.msra.mxu0 0
        %435 = vmatprep.subr.bf16.mxu0 0
        %436 = vmatpush1.bf16.msra.mxu0 0
        %437 = vmatprep.subr.bf16.mxu0 0
        %438 = vmatpush1.bf16.msra.mxu0 0
        %439 = vmatprep.subr.bf16.mxu0 0
        %440 = vmatpush1.bf16.msra.mxu0 0
        %441 = vmatprep.subr.bf16.mxu0 0
        %442 = vmatpush1.bf16.msra.mxu0 0
        %443 = vmatprep.subr.bf16.mxu0 0
        %444 = vmatpush1.bf16.msra.mxu0 0
        %445 = vmatprep.subr.bf16.mxu0 0
        %446 = vmatpush1.bf16.msra.mxu0 0
        %447 = vmatprep.subr.bf16.mxu0 0
        %448 = vmatpush1.bf16.msra.mxu0 0
        %449 = vmatprep.subr.bf16.mxu0 0
        %450 = vmatpush1.bf16.msra.mxu0 0
        %451 = vmatprep.mubr.bf16.mxu0 0
        %452 = vmatmul.mubr.bf16.gmra.mrb[0].mxu0 %v417
        %v453 = vpop.f32.mrb[0].mxu0
        %v454 = vadd.f32 %v403, %v453
        %v455 = vpop.f32.mrb[0].mxu0
        %v456 = vpop.f32.mrb[0].mxu0
        %v457 = vpop.f32.mrb[0].mxu0
        %458 = vdwg.mxu0
        %v459 = vpack.c.bf16 %v454, %v454
        %v460 = vld [vmem:[%s5] sm:$0xf]
        %v461 = vld [vmem:[%s5 + $0x4] sm:$0xf]
        %v462 = vld [vmem:[%s5 + $0x8] sm:$0xf]
        %v463 = vld [vmem:[%s5 + $0xc] sm:$0xf]
        %v468 = vunpack.c.l.b16 %v460
        %v469 = vunpack.c.l.b16 %v461
        %v470 = vunpack.c.l.b16 %v462
        %v471 = vunpack.c.l.b16 %v463
        %v472 = vpack.c.b16 %v469, %v468
        %v473 = vpack.c.b16 %v471, %v470
        %v477 = vsel %vm369, %v459, 0
        %479 = vmatprep.subr.bf16.mxu0 0
        %480 = vmatpush1.bf16.msra.mxu0 %v472
        %481 = vmatprep.subr.bf16.mxu0 0
        %482 = vmatpush1.bf16.msra.mxu0 %v473
        %483 = vmatprep.subr.bf16.mxu0 0
        %484 = vmatpush1.bf16.msra.mxu0 0
        %485 = vmatprep.subr.bf16.mxu0 0
        %486 = vmatpush1.bf16.msra.mxu0 0
        %487 = vmatprep.subr.bf16.mxu0 0
        %488 = vmatpush1.bf16.msra.mxu0 0
        %489 = vmatprep.subr.bf16.mxu0 0
        %490 = vmatpush1.bf16.msra.mxu0 0
        %491 = vmatprep.subr.bf16.mxu0 0
        %492 = vmatpush1.bf16.msra.mxu0 0
        %493 = vmatprep.subr.bf16.mxu0 0
        %494 = vmatpush1.bf16.msra.mxu0 0
        %495 = vmatprep.subr.bf16.mxu0 0
        %496 = vmatpush1.bf16.msra.mxu0 0
        %497 = vmatprep.subr.bf16.mxu0 0
        %498 = vmatpush1.bf16.msra.mxu0 0
        %499 = vmatprep.subr.bf16.mxu0 0
        %500 = vmatpush1.bf16.msra.mxu0 0
        %501 = vmatprep.subr.bf16.mxu0 0
        %502 = vmatpush1.bf16.msra.mxu0 0
        %503 = vmatprep.subr.bf16.mxu0 0
        %504 = vmatpush1.bf16.msra.mxu0 0
        %505 = vmatprep.subr.bf16.mxu0 0
        %506 = vmatpush1.bf16.msra.mxu0 0
        %507 = vmatprep.subr.bf16.mxu0 0
        %508 = vmatpush1.bf16.msra.mxu0 0
        %509 = vmatprep.subr.bf16.mxu0 0
        %510 = vmatpush1.bf16.msra.mxu0 0
        %511 = vmatprep.mubr.bf16.mxu0 0
        %512 = vmatmul.mubr.bf16.gmra.mrb[0].mxu0 %v477
        %v513 = vpop.f32.mrb[0].mxu0
        %v514 = vadd.f32 0.0, %v513
        %v515 = vpop.f32.mrb[0].mxu0
        %v516 = vpop.f32.mrb[0].mxu0
        %v517 = vpop.f32.mrb[0].mxu0
        %518 = vdwg.mxu0
        %v519 = vpack.c.bf16 %v514, %v514
        %vm520 = vcmask 27648
        %521 = vst.msk [vmem:[#allocation2] sm:$0xf] %vm520, %v519
        %v522 = vld [vmem:[%s6] sm:$0xf]
        %v523 = vld [vmem:[%s6 + $0x4] sm:$0xf]
        %v524 = vld [vmem:[%s6 + $0x8] sm:$0xf]
        %v525 = vld [vmem:[%s6 + $0xc] sm:$0xf]
        %v530 = vunpack.c.l.b16 %v522
        %v531 = vunpack.c.l.b16 %v523
        %v532 = vunpack.c.l.b16 %v524
        %v533 = vunpack.c.l.b16 %v525
        %v534 = vpack.c.b16 %v531, %v530
        %v535 = vpack.c.b16 %v533, %v532
        %538 = vmatprep.subr.bf16.mxu0 0
        %539 = vmatpush1.bf16.msra.mxu0 %v534
        %540 = vmatprep.subr.bf16.mxu0 0
        %541 = vmatpush1.bf16.msra.mxu0 %v535
        %542 = vmatprep.subr.bf16.mxu0 0
        %543 = vmatpush1.bf16.msra.mxu0 0
        %544 = vmatprep.subr.bf16.mxu0 0
        %545 = vmatpush1.bf16.msra.mxu0 0
        %546 = vmatprep.subr.bf16.mxu0 0
        %547 = vmatpush1.bf16.msra.mxu0 0
        %548 = vmatprep.subr.bf16.mxu0 0
        %549 = vmatpush1.bf16.msra.mxu0 0
        %550 = vmatprep.subr.bf16.mxu0 0
        %551 = vmatpush1.bf16.msra.mxu0 0
        %552 = vmatprep.subr.bf16.mxu0 0
        %553 = vmatpush1.bf16.msra.mxu0 0
        %554 = vmatprep.subr.bf16.mxu0 0
        %555 = vmatpush1.bf16.msra.mxu0 0
        %556 = vmatprep.subr.bf16.mxu0 0
        %557 = vmatpush1.bf16.msra.mxu0 0
        %558 = vmatprep.subr.bf16.mxu0 0
        %559 = vmatpush1.bf16.msra.mxu0 0
        %560 = vmatprep.subr.bf16.mxu0 0
        %561 = vmatpush1.bf16.msra.mxu0 0
        %562 = vmatprep.subr.bf16.mxu0 0
        %563 = vmatpush1.bf16.msra.mxu0 0
        %564 = vmatprep.subr.bf16.mxu0 0
        %565 = vmatpush1.bf16.msra.mxu0 0
        %566 = vmatprep.subr.bf16.mxu0 0
        %567 = vmatpush1.bf16.msra.mxu0 0
        %568 = vmatprep.subr.bf16.mxu0 0
        %569 = vmatpush1.bf16.msra.mxu0 0
        %570 = vmatprep.mubr.bf16.mxu0 0
        %571 = vmatmul.mubr.bf16.gmra.mrb[0].mxu0 %v477
        %v572 = vpop.f32.mrb[0].mxu0
        %v573 = vadd.f32 0.0, %v572
        %v574 = vpop.f32.mrb[0].mxu0
        %v575 = vpop.f32.mrb[0].mxu0
        %v576 = vpop.f32.mrb[0].mxu0
        %577 = vdwg.mxu0
        %v578 = vpack.c.bf16 %v573, %v573
        %579 = vst.msk [vmem:[#allocation3] sm:$0xf] %vm520, %v578
      $region52: #{ella_proxy_unet_forward.1} parent=47 // pred_fallthru
        _
      %v580 = vld [vmem:[%s340] sm:$0xf]
      %v581 = vld [vmem:[#allocation2] sm:$0xf]
      %v582 = vpack.c.bf16 %v580, %v580
      %vm583 = vcmask 31744
      %v585 = vsel %vm583, %v581, 0
      %vm587 = vcmask 1041408
      %v589 = vsel %vm587, %v582, 0
      %591 = vmatprep.subr.bf16.mxu0 0
      %592 = vmatpush1.bf16.msra.mxu0 %v589
      %593 = vmatprep.subr.bf16.mxu0 0
      %594 = vmatpush1.bf16.msra.mxu0 0
      %595 = vmatprep.subr.bf16.mxu0 0
      %596 = vmatpush1.bf16.msra.mxu0 0
      %597 = vmatprep.subr.bf16.mxu0 0
      %598 = vmatpush1.bf16.msra.mxu0 0
      %599 = vmatprep.subr.bf16.mxu0 0
      %600 = vmatpush1.bf16.msra.mxu0 0
      %601 = vmatprep.subr.bf16.mxu0 0
      %602 = vmatpush1.bf16.msra.mxu0 0
      %603 = vmatprep.subr.bf16.mxu0 0
      %604 = vmatpush1.bf16.msra.mxu0 0
      %605 = vmatprep.subr.bf16.mxu0 0
      %606 = vmatpush1.bf16.msra.mxu0 0
      %607 = vmatprep.subr.bf16.mxu0 0
      %608 = vmatpush1.bf16.msra.mxu0 0
      %609 = vmatprep.subr.bf16.mxu0 0
      %610 = vmatpush1.bf16.msra.mxu0 0
      %611 = vmatprep.subr.bf16.mxu0 0
      %612 = vmatpush1.bf16.msra.mxu0 0
      %613 = vmatprep.subr.bf16.mxu0 0
      %614 = vmatpush1.bf16.msra.mxu0 0
      %615 = vmatprep.subr.bf16.mxu0 0
      %616 = vmatpush1.bf16.msra.mxu0 0
      %617 = vmatprep.subr.bf16.mxu0 0
      %618 = vmatpush1.bf16.msra.mxu0 0
      %619 = vmatprep.subr.bf16.mxu0 0
      %620 = vmatpush1.bf16.msra.mxu0 0
      %621 = vmatprep.subr.bf16.mxu0 0
      %622 = vmatpush1.bf16.msra.mxu0 0
      %623 = vmatprep.mubr.bf16.mxu0 0
      %624 = vmatmul.mubr.bf16.gmra.mrb[0].mxu0 %v585
      %v625 = vpop.f32.mrb[0].mxu0
      %v626 = vadd.f32 0.0, %v625
      %v627 = vpop.f32.mrb[0].mxu0
      %v628 = vpop.f32.mrb[0].mxu0
      %v629 = vpop.f32.mrb[0].mxu0
      %630 = vdwg.mxu0
      %v631 = vrot.slane %v626, 4
      %v632 = vmax.f32 %v626, %v631
      %v633 = vrot.slane %v632, 2
      %v634 = vmax.f32 %v632, %v633
      %v635 = vrot.slane %v634, 1
      %v636 = vmax.f32 %v634, %v635
      %v637 = vsub.f32 %v626, %v636
      %v638 = vmul.f32 %v637, 1.442695
      %v639 = vpow.pop %v638
      %v640 = vrot.slane %v639, 4
      %v641 = vadd.f32 %v639, %v640
      %v642 = vrot.slane %v641, 2
      %v643 = vadd.f32 %v641, %v642
      %v644 = vrot.slane %v643, 1
      %v645 = vadd.f32 %v643, %v644
      %v646 = vld [vmem:[#allocation3] sm:$0xf]
      %v647 = vpack.c.bf16 %v639, %v639
      %648 = vxpose.xlu0.c.b16.start [1/8] %v646, 128
      %649 = vxpose.xlu0.c.b16.cont [2/8] 0, 128
      %650 = vxpose.xlu0.c.b16.cont [3/8] 0, 128
      %651 = vxpose.xlu0.c.b16.cont [4/8] 0, 128
      %652 = vxpose.xlu0.c.b16.cont [5/8] 0, 128
      %653 = vxpose.xlu0.c.b16.cont [6/8] 0, 128
      %654 = vxpose.xlu0.c.b16.cont [7/8] 0, 128
      %655 = vxpose.xlu0.c.b16.end [8/8] 0, 128
      %v656 = vpop.trf.xlu0
      %v657 = vpop.trf.xlu0
      %v658 = vpop.trf.xlu0
      %v659 = vpop.trf.xlu0
      %v660 = vpop.trf.xlu0
      %v661 = vpop.trf.xlu0
      %v662 = vpop.trf.xlu0
      %v663 = vpop.trf.xlu0
      %vm664 = vcmask 64512
      %v666 = vsel %vm664, %v656, 0
      %vm668 = vcmask 1043456
      %v670 = vsel %vm668, %v647, 0
      %672 = vmatprep.subr.bf16.mxu0 0
      %673 = vmatpush1.bf16.msra.mxu0 %v670
      %674 = vmatprep.subr.bf16.mxu0 0
      %675 = vmatpush1.bf16.msra.mxu0 0
      %676 = vmatprep.subr.bf16.mxu0 0
      %677 = vmatpush1.bf16.msra.mxu0 0
      %678 = vmatprep.subr.bf16.mxu0 0
      %679 = vmatpush1.bf16.msra.mxu0 0
      %680 = vmatprep.subr.bf16.mxu0 0
      %681 = vmatpush1.bf16.msra.mxu0 0
      %682 = vmatprep.subr.bf16.mxu0 0
      %683 = vmatpush1.bf16.msra.mxu0 0
      %684 = vmatprep.subr.bf16.mxu0 0
      %685 = vmatpush1.bf16.msra.mxu0 0
      %686 = vmatprep.subr.bf16.mxu0 0
      %687 = vmatpush1.bf16.msra.mxu0 0
      %688 = vmatprep.subr.bf16.mxu0 0
      %689 = vmatpush1.bf16.msra.mxu0 0
      %690 = vmatprep.subr.bf16.mxu0 0
      %691 = vmatpush1.bf16.msra.mxu0 0
      %692 = vmatprep.subr.bf16.mxu0 0
      %693 = vmatpush1.bf16.msra.mxu0 0
      %694 = vmatprep.subr.bf16.mxu0 0
      %695 = vmatpush1.bf16.msra.mxu0 0
      %696 = vmatprep.subr.bf16.mxu0 0
      %697 = vmatpush1.bf16.msra.mxu0 0
      %698 = vmatprep.subr.bf16.mxu0 0
      %699 = vmatpush1.bf16.msra.mxu0 0
      %700 = vmatprep.subr.bf16.mxu0 0
      %701 = vmatpush1.bf16.msra.mxu0 0
      %702 = vmatprep.subr.bf16.mxu0 0
      %703 = vmatpush1.bf16.msra.mxu0 0
      %704 = vmatprep.mubr.bf16.mxu0 0
      %705 = vmatmul.mubr.bf16.gmra.mrb[0].mxu0 %v666
      %v706 = vpop.f32.mrb[0].mxu0
      %v707 = vadd.f32 0.0, %v706
      %v708 = vpop.f32.mrb[0].mxu0
      %v709 = vpop.f32.mrb[0].mxu0
      %v710 = vpop.f32.mrb[0].mxu0
      %711 = vdwg.mxu0
      %v712 = vrcp.pop %v645
      %v713 = vmul.f32 1.0, %v712
      %v714 = vmul.f32 %v707, %v713
      %v715 = vld [vmem:[%s352] sm:$0xf]
      %717 = vset.pattern.permute.xlu0 0
      %718 = vperm.xlu0 %717, %v715
      %v719 = vpop.permute.xlu0 %718
      %v721 = vadd.f32 %v714, %v719
      %v722 = vadd.f32 %v580, %v721
      %723 = vst [vmem:[%s360] sm:$0xf] %v722
      %p724 = scmp.lt.s32.totalorder %s22, 1
      %s725 = scalar_select %p724, %s22, 1
      %p726 = scmp.lt.s32.totalorder %s23, 1
      %s727 = scalar_select %p726, %s23, 1
      %s728 = smul.addr %s725, 2
      %s729 = sadd.s32 %s727, %s728
      %s730 = smul.addr %s729, 4
      %s731 = scalar_lea.vmem %s7, %s730
      // Predicated region
      $region53: #{ella_proxy_unet_forward.1} parent=47 // pred_check
        %p732 = pneg %p219
      $region54: #{ella_proxy_unet_forward.1} parent=47 // pred_check_branch
        %734 = sbr.rel (%p732) target = $region56
      $region55: #{ella_proxy_unet_forward.1} parent=47 // pred_region
        _
      $region56: #{ella_proxy_unet_forward.1} parent=47 // pred_fallthru
        _
    $region48: #{ella_proxy_unet_forward.1} parent=5 // pred_fallthru
      _
    %p735 = scmp.le.s32.totalorder 2, %s13
    // Predicated region
    $region57: #{ella_proxy_unet_forward.1} parent=5 // pred_check
      %p736 = pneg %p735
    $region58: #{ella_proxy_unet_forward.1} parent=5 // pred_check_branch
      %738 = sbr.rel (%p736) target = $region60
    $region59: #{ella_proxy_unet_forward.1} parent=5 // pred_region
      %s739 = ssub.s32 %s13, 2
      // Predicated region
      $region61: #{ella_proxy_unet_forward.1} parent=59 // pred_check
        %p740 = pneg %p225
      $region62: #{ella_proxy_unet_forward.1} parent=59 // pred_check_branch
        %742 = sbr.rel (%p740) target = $region64
      $region63: #{ella_proxy_unet_forward.1} parent=59 // pred_region
        %p743 = scmp.lt.s32.totalorder %s24, 1
        %s744 = scalar_select %p743, %s24, 1
        %p745 = scmp.lt.s32.totalorder %s25, 1
        %s746 = scalar_select %p745, %s25, 1
        %s747 = smul.addr %s744, 2
        %s748 = sadd.s32 %s746, %s747
        %s749 = smul.addr %s748, 4
        %s750 = scalar_lea.vmem %s7, %s749
      $region64: #{ella_proxy_unet_forward.1} parent=59 // pred_fallthru
        _
    $region60: #{ella_proxy_unet_forward.1} parent=5 // pred_fallthru
      _
  $region6: #{ella_proxy_unet_forward.1} parent=0 // loop_footer
    %s17 = sadd.s32 1, %s13
  $region7: #{ella_proxy_unet_forward.1} parent=0 // loop_footer_branch
    %12 = sbr.rel target = $region3
  $region8: #{ella_proxy_unet_forward.1} parent=0 // loop_exit
    _

</llo_original>
